<compile_context>
chip_gen: v6e
topology: v6e:2x2x1
jax: 0.10.0
libtpu: 0.0.40
codegen_flags: <defaults>
</compile_context>

<pallas_src>
import functools

import jax
import jax.numpy as jnp
from jax.experimental import pallas as pl
from jax.experimental.pallas import tpu as pltpu

NUM_ATOM_TYPE = 119
NUM_CHIRALITY_TAG = 3
NUM_BOND_TYPE = 6
NUM_BOND_DIRECTION = 3
EPS_BN = 1e-5


def _nbytes(shape, dtype):
    n = 1
    for s in shape:
        n *= int(s)
    return n * jnp.dtype(dtype).itemsize


def _vmem_limit(blocks):
    # blocks: (shape, dtype) of per-grid-step resident tiles; x2 for double buffering.
    total = sum(_nbytes(s, d) for s, d in blocks)
    return int(min(64 << 20, max(8 << 20, 2 * total + (2 << 20))))


def _vmem_specs(n):
    return [pl.BlockSpec(memory_space=pltpu.MemorySpace.VMEM) for _ in range(n)]


# ---------------------------------------------------------------------------
# Kernel 1: fused num_layer x (GINEConv + BatchNorm1d [+ ReLU]), grid over layers
# ---------------------------------------------------------------------------
def _fused_gin_kernel(h0_ref, adj_ref, esum_ref,
                      w1_ref, b1_ref, w2_ref, b2_ref,
                      gamma_ref, beta_ref, out_ref, h_sc):
    layer = pl.program_id(0)
    is_last = layer == pl.num_programs(0) - 1

    @pl.when(layer == 0)
    def _():
        h_sc[...] = h0_ref[...]                                  # initial node embedding

    h = h_sc[...]                                                # [N, D] f32
    # GINEConv message+aggregate ("add"):  aggr = A @ h + sum_{e: dst(e)=n} edge_emb_e
    # A is 0/1/count-valued -> exact in bf16; bf16 x bf16 MXU path, f32 accumulation.
    aggr = jnp.dot(adj_ref[...], h.astype(jnp.bfloat16),
                   preferred_element_type=jnp.float32) + esum_ref[0]
    # GINEConv.update: Linear(D, 2D) -> ReLU -> Linear(2D, D)
    z = jnp.dot(aggr, w1_ref[0], preferred_element_type=jnp.float32) + b1_ref[0]
    z = jnp.maximum(z, 0.0)
    z = jnp.dot(z, w2_ref[0], preferred_element_type=jnp.float32) + b2_ref[0]
    # BatchNorm1d (training-mode batch statistics, biased variance, eps=1e-5)
    mean = jnp.mean(z, axis=0, keepdims=True)
    var = jnp.mean((z - mean) ** 2, axis=0, keepdims=True)
    z = (z - mean) * jax.lax.rsqrt(var + EPS_BN) * gamma_ref[0] + beta_ref[0]

    # h for the next layer: ReLU on all but the last layer (dropout p=0 == identity)
    h_sc[...] = z

    @pl.when(jnp.logical_not(is_last))
    def _():
        h_sc[...] = jnp.maximum(z, 0.0)

    @pl.when(is_last)
    def _():
        out_ref[...] = z                                         # final node features


def gin_encoder(h0, adj_bf16, esum, w1s, b1s, w2s, b2s, gammas, betas):
    num_layer = esum.shape[0]
    n, d = h0.shape
    d2 = w1s.shape[-1]
    blocks = [((n, d), jnp.float32), ((n, n), jnp.bfloat16), ((n, d), jnp.float32),
              ((d, d2), jnp.float32), ((1, d2), jnp.float32),
              ((d2, d), jnp.float32), ((1, d), jnp.float32),
              ((1, d), jnp.float32), ((1, d), jnp.float32),
              ((n, d), jnp.float32),            # output
              ((n, d), jnp.float32)]            # scratch
    return pl.pallas_call(
        _fused_gin_kernel,
        out_shape=jax.ShapeDtypeStruct((n, d), jnp.float32),
        grid_spec=pltpu.PrefetchScalarGridSpec(
            num_scalar_prefetch=0,
            grid=(num_layer,),
            in_specs=[
                pl.BlockSpec((n, d), lambda l: (0, 0)),        # h0      (constant block)
                pl.BlockSpec((n, n), lambda l: (0, 0)),        # A       (DMA'd once)
                pl.BlockSpec((1, n, d), lambda l: (l, 0, 0)),  # per-layer edge-emb sums
                pl.BlockSpec((1, d, d2), lambda l: (l, 0, 0)),  # w1
                pl.BlockSpec((1, 1, d2), lambda l: (l, 0, 0)),  # b1
                pl.BlockSpec((1, d2, d), lambda l: (l, 0, 0)),  # w2
                pl.BlockSpec((1, 1, d), lambda l: (l, 0, 0)),   # b2
                pl.BlockSpec((1, 1, d), lambda l: (l, 0, 0)),   # gamma
                pl.BlockSpec((1, 1, d), lambda l: (l, 0, 0)),   # beta
            ],
            out_specs=pl.BlockSpec((n, d), lambda l: (0, 0)),  # h stays VMEM-resident
            scratch_shapes=[pltpu.VMEM((n, d), jnp.float32)],
        ),
        compiler_params=pltpu.CompilerParams(
            dimension_semantics=("arbitrary",),    # layers are sequentially dependent
            vmem_limit_bytes=_vmem_limit(blocks),
        ),
    )(h0, adj_bf16, esum, w1s, b1s, w2s, b2s, gammas, betas)


# ---------------------------------------------------------------------------
# Kernel 2: global mean pool + feat_lin + softplus prediction head
# ---------------------------------------------------------------------------
def _softplus(x):
    # matches torch.nn.Softplus(beta=1, threshold=20)
    return jnp.where(x > 20.0, x, jnp.log1p(jnp.exp(jnp.minimum(x, 20.0))))


def _head_kernel(h_ref, pool_ref, inv_ref, wf_ref, bf_ref,
                 w1_ref, b1_ref, w2_ref, b2_ref, w3_ref, b3_ref,
                 feat_ref, pred_ref):
    # mean pool: exact 0/1 one-hot matmul, then per-graph 1/count scale (free VPU op)
    pooled = jnp.dot(pool_ref[...].astype(jnp.float32), h_ref[...],
                     preferred_element_type=jnp.float32) * inv_ref[...]      # [G, D]
    feat = jnp.dot(pooled, wf_ref[...], preferred_element_type=jnp.float32) + bf_ref[...]
    feat_ref[...] = feat                                                     # h after feat_lin
    a = _softplus(jnp.dot(feat, w1_ref[...], preferred_element_type=jnp.float32) + b1_ref[...])
    a = _softplus(jnp.dot(a, w2_ref[...], preferred_element_type=jnp.float32) + b2_ref[...])
    pred_ref[...] = jnp.dot(a, w3_ref[...], preferred_element_type=jnp.float32) + b3_ref[...]


def head(h, pool01, inv_cnt, wf, bf, w1, b1, w2, b2, w3, b3):
    g = pool01.shape[0]
    feat_dim = wf.shape[1]
    out_dim = w3.shape[1]
    blocks = [(h.shape, jnp.float32), (pool01.shape, jnp.bfloat16),
              (inv_cnt.shape, jnp.float32), (wf.shape, jnp.float32),
              (w1.shape, jnp.float32), (w2.shape, jnp.float32), (w3.shape, jnp.float32),
              ((g, feat_dim), jnp.float32), ((g, out_dim), jnp.float32)]
    return pl.pallas_call(
        _head_kernel,
        out_shape=(jax.ShapeDtypeStruct((g, feat_dim), jnp.float32),
                   jax.ShapeDtypeStruct((g, out_dim), jnp.float32)),
        in_specs=_vmem_specs(11),
        out_specs=(pl.BlockSpec(memory_space=pltpu.MemorySpace.VMEM),
                   pl.BlockSpec(memory_space=pltpu.MemorySpace.VMEM)),
        compiler_params=pltpu.CompilerParams(vmem_limit_bytes=_vmem_limit(blocks)),
    )(h, pool01, inv_cnt, wf, bf, w1, b1, w2, b2, w3, b3)


# ---------------------------------------------------------------------------
# Deterministic parameter initialization (matches the module's shapes)
# ---------------------------------------------------------------------------
def init_params(key, num_layer, emb_dim, feat_dim, out_dim):
    def lin(k, fan_in, fan_out):
        k1, k2 = jax.random.split(k)
        bound = 1.0 / jnp.sqrt(fan_in)
        w = jax.random.uniform(k1, (fan_in, fan_out), jnp.float32, -bound, bound)
        b = jax.random.uniform(k2, (1, fan_out), jnp.float32, -bound, bound)
        return w, b

    def xavier(k, n, d):
        bound = jnp.sqrt(6.0 / (n + d))
        return jax.random.uniform(k, (n, d), jnp.float32, -bound, bound)

    keys = iter(jax.random.split(key, 8 * num_layer + 16))
    params = {
        'x_emb1': xavier(next(keys), NUM_ATOM_TYPE, emb_dim),
        'x_emb2': xavier(next(keys), NUM_CHIRALITY_TAG, emb_dim),
    }
    layers = []
    for _ in range(num_layer):
        w1, b1 = lin(next(keys), emb_dim, 2 * emb_dim)
        w2, b2 = lin(next(keys), 2 * emb_dim, emb_dim)
        layers.append(dict(
            w1=w1, b1=b1, w2=w2, b2=b2,
            e1=xavier(next(keys), NUM_BOND_TYPE, emb_dim),
            e2=xavier(next(keys), NUM_BOND_DIRECTION, emb_dim),
            gamma=jnp.ones((1, emb_dim), jnp.float32),
            beta=jnp.zeros((1, emb_dim), jnp.float32),
        ))
    params['layers'] = layers
    params['wf'], params['bf'] = lin(next(keys), emb_dim, feat_dim)
    params['wp1'], params['bp1'] = lin(next(keys), feat_dim, feat_dim // 2)
    params['wp2'], params['bp2'] = lin(next(keys), feat_dim // 2, feat_dim // 2)
    params['wp3'], params['bp3'] = lin(next(keys), feat_dim // 2, out_dim)
    return params


# ---------------------------------------------------------------------------
# Forward pass (JAX glue: embedding lookups + graph-structure prep, then kernels)
# ---------------------------------------------------------------------------
def ginet_forward(params, x, edge_index, edge_attr, batch, num_graphs, num_layer):
    n = x.shape[0]
    emb_dim = params['x_emb1'].shape[1]

    # node embedding: x_embedding1(x[:,0]) + x_embedding2(x[:,1])
    h0 = params['x_emb1'][x[:, 0]] + params['x_emb2'][x[:, 1]]

    # add_self_loops + self-loop edge_attr ([5, 0]) — identical for every layer
    loops = jnp.arange(n, dtype=edge_index.dtype)
    src = jnp.concatenate([edge_index[0], loops])
    dst = jnp.concatenate([edge_index[1], loops])
    self_attr = jnp.concatenate(
        [jnp.full((n, 1), 5, edge_attr.dtype), jnp.zeros((n, 1), edge_attr.dtype)], axis=1)
    ea = jnp.concatenate([edge_attr, self_attr], axis=0)

    # Add-aggregation is linear: aggr = A @ h + esum_l, with
    #   A[dst, src] += 1   (dense adjacency incl. self loops; small ints -> exact in bf16)
    adj = jnp.zeros((n, n), jnp.float32).at[dst, src].add(1.0).astype(jnp.bfloat16)

    # Per-layer edge-embedding contributions pre-scattered onto target nodes: [L, N, D]
    esum = jnp.stack([
        jnp.zeros((n, emb_dim), jnp.float32).at[dst].add(
            p['e1'][ea[:, 0]] + p['e2'][ea[:, 1]])
        for p in params['layers']], axis=0)

    # Stack per-layer weights so a single fused pallas_call indexes them by layer.
    w1s = jnp.stack([p['w1'] for p in params['layers']])
    b1s = jnp.stack([p['b1'] for p in params['layers']])
    w2s = jnp.stack([p['w2'] for p in params['layers']])
    b2s = jnp.stack([p['b2'] for p in params['layers']])
    gammas = jnp.stack([p['gamma'] for p in params['layers']])
    betas = jnp.stack([p['beta'] for p in params['layers']])

    h = gin_encoder(h0, adj, esum, w1s, b1s, w2s, b2s, gammas, betas)

    # global_mean_pool: pure 0/1 one-hot (exact in bf16) + guarded 1/count scale in-kernel
    pool01 = jax.nn.one_hot(batch, num_graphs, dtype=jnp.float32).T        # [G, N]
    counts = jnp.sum(pool01, axis=1, keepdims=True)
    inv_cnt = 1.0 / jnp.maximum(counts, 1.0)                               # no NaN on empty graph
    pool01 = pool01.astype(jnp.bfloat16)

    feat, pred = head(h, pool01, inv_cnt, params['wf'], params['bf'],
                      params['wp1'], params['bp1'],
                      params['wp2'], params['bp2'],
                      params['wp3'], params['bp3'])
    return feat, pred


if __name__ == "__main__":
    NUM_LAYER, EMB_DIM, FEAT_DIM, OUT_DIM = 5, 32, 64, 2   # out_dim=2 (classification)
    N_PER_G, G = 8, 2
    N = N_PER_G * G

    key = jax.random.PRNGKey(0)
    k_params, kx1, kx2, kb1, kb2 = jax.random.split(key, 5)
    params = init_params(k_params, NUM_LAYER, EMB_DIM, FEAT_DIM, OUT_DIM)

    # node features: [N, 2] int (atom type, chirality tag)
    x = jnp.stack([jax.random.randint(kx1, (N,), 0, NUM_ATOM_TYPE),
                   jax.random.randint(kx2, (N,), 0, NUM_CHIRALITY_TAG)], axis=1).astype(jnp.int32)

    # bidirectional chain edges inside each of the two graphs
    edges = []
    for g in range(G):
        off = g * N_PER_G
        for i in range(N_PER_G - 1):
            edges.append((off + i, off + i + 1))
            edges.append((off + i + 1, off + i))
    edge_index = jnp.array(edges, dtype=jnp.int32).T                  # [2, E]
    E = edge_index.shape[1]
    edge_attr = jnp.stack([jax.random.randint(kb1, (E,), 0, NUM_BOND_TYPE - 1),
                           jax.random.randint(kb2, (E,), 0, NUM_BOND_DIRECTION)],
                          axis=1).astype(jnp.int32)                   # [E, 2]
    batch = jnp.repeat(jnp.arange(G, dtype=jnp.int32), N_PER_G)       # [N]

    feat, pred = ginet_forward(params, x, edge_index, edge_attr, batch, G, NUM_LAYER)
    jax.block_until_ready((feat, pred))
    assert feat.shape == (G, FEAT_DIM) and pred.shape == (G, OUT_DIM)
    assert bool(jnp.all(jnp.isfinite(feat))) and bool(jnp.all(jnp.isfinite(pred)))
    print("KERNEL_OK")
</pallas_src>

<mosaic_0001>
module attributes {stable_mosaic.version = 11 : i64} {
  func.func @_fused_gin_kernel(%arg0: i32, %arg1: memref<16x32xf32, #tpu.memory_space<vmem>>, %arg2: memref<16x16xbf16, #tpu.memory_space<vmem>>, %arg3: memref<1x16x32xf32, #tpu.memory_space<vmem>>, %arg4: memref<1x32x64xf32, #tpu.memory_space<vmem>>, %arg5: memref<1x1x64xf32, #tpu.memory_space<vmem>>, %arg6: memref<1x64x32xf32, #tpu.memory_space<vmem>>, %arg7: memref<1x1x32xf32, #tpu.memory_space<vmem>>, %arg8: memref<1x1x32xf32, #tpu.memory_space<vmem>>, %arg9: memref<1x1x32xf32, #tpu.memory_space<vmem>>, %arg10: memref<16x32xf32, #tpu.memory_space<vmem>>, %arg11: memref<16x32xf32, #tpu.memory_space<vmem>>) attributes {dimension_semantics = [#tpu.dimension_semantics<arbitrary>], iteration_bounds = array<i64: 5>, scalar_prefetch = 0 : i64, scratch_operands = 1 : i64, tpu.core_type = #tpu.core_type<tc>, window_params = [{pipeline_mode = #tpu.pipeline_mode<synchronous>, transform_indices = @transform_0, window_bounds = array<i64: 16, 32>}, {pipeline_mode = #tpu.pipeline_mode<synchronous>, transform_indices = @transform_1, window_bounds = array<i64: 16, 16>}, {transform_indices = @transform_2, window_bounds = array<i64: 1, 16, 32>}, {transform_indices = @transform_3, window_bounds = array<i64: 1, 32, 64>}, {transform_indices = @transform_4, window_bounds = array<i64: 1, 1, 64>}, {transform_indices = @transform_5, window_bounds = array<i64: 1, 64, 32>}, {transform_indices = @transform_6, window_bounds = array<i64: 1, 1, 32>}, {transform_indices = @transform_7, window_bounds = array<i64: 1, 1, 32>}, {transform_indices = @transform_8, window_bounds = array<i64: 1, 1, 32>}, {pipeline_mode = #tpu.pipeline_mode<synchronous>, transform_indices = @transform_9, window_bounds = array<i64: 16, 32>}]} {
    %c4_i32 = arith.constant 4 : i32
    %0 = arith.cmpi eq, %arg0, %c4_i32 : i32
    %c0_i32 = arith.constant 0 : i32
    %1 = arith.cmpi eq, %arg0, %c0_i32 : i32
    %2 = arith.extui %1 : i1 to i32
    %c0_i32_0 = arith.constant 0 : i32
    %3 = arith.cmpi ne, %2, %c0_i32_0 : i32
    scf.if %3 {
      %c0_37 = arith.constant 0 : index
      %c0_38 = arith.constant 0 : index
      %59 = vector.load %arg1[%c0_37, %c0_38] : memref<16x32xf32, #tpu.memory_space<vmem>>, vector<16x32xf32>
      %c0_39 = arith.constant 0 : index
      %c0_40 = arith.constant 0 : index
      %60 = vector.load %arg11[%c0_39, %c0_40] : memref<16x32xf32, #tpu.memory_space<vmem>>, vector<16x32xf32>
      tpu.vector_store %arg11[%c0_39, %c0_40], %59 {strides = array<i32>} : memref<16x32xf32, #tpu.memory_space<vmem>>, vector<16x32xf32>,
    } else {
    }
    %c0 = arith.constant 0 : index
    %c0_1 = arith.constant 0 : index
    %4 = vector.load %arg11[%c0, %c0_1] : memref<16x32xf32, #tpu.memory_space<vmem>>, vector<16x32xf32>
    %c0_2 = arith.constant 0 : index
    %c0_3 = arith.constant 0 : index
    %5 = vector.load %arg2[%c0_2, %c0_3] : memref<16x16xbf16, #tpu.memory_space<vmem>>, vector<16x16xbf16>
    %6 = arith.truncf %4 : vector<16x32xf32> to vector<16x32xbf16>
    %cst = arith.constant dense<0.000000e+00> : vector<16x32xf32>
    %7 = tpu.matmul %5, %6, %cst {dimension_numbers = #tpu.dot_dimension_numbers<[1], [0], [0], [1], [0, 0, 1, 1], [], []>} : vector<16x16xbf16>, vector<16x32xbf16>, vector<16x32xf32> -> vector<16x32xf32>
    %c0_4 = arith.constant 0 : index
    %c0_5 = arith.constant 0 : index
    %c0_6 = arith.constant 0 : index
    %8 = vector.load %arg3[%c0_4, %c0_5, %c0_6] : memref<1x16x32xf32, #tpu.memory_space<vmem>>, vector<1x16x32xf32>
    %9 = vector.shape_cast %8 : vector<1x16x32xf32> to vector<16x32xf32>
    %10 = arith.addf %7, %9 : vector<16x32xf32>
    %c0_7 = arith.constant 0 : index
    %c0_8 = arith.constant 0 : index
    %c0_9 = arith.constant 0 : index
    %11 = vector.load %arg4[%c0_7, %c0_8, %c0_9] : memref<1x32x64xf32, #tpu.memory_space<vmem>>, vector<1x32x64xf32>
    %12 = vector.shape_cast %11 : vector<1x32x64xf32> to vector<32x64xf32>
    %cst_10 = arith.constant dense<0.000000e+00> : vector<16x64xf32>
    %13 = tpu.matmul %10, %12, %cst_10 {dimension_numbers = #tpu.dot_dimension_numbers<[1], [0], [0], [1], [0, 0, 1, 1], [], []>} : vector<16x32xf32>, vector<32x64xf32>, vector<16x64xf32> -> vector<16x64xf32>
    %c0_11 = arith.constant 0 : index
    %c0_12 = arith.constant 0 : index
    %c0_13 = arith.constant 0 : index
    %14 = vector.load %arg5[%c0_11, %c0_12, %c0_13] : memref<1x1x64xf32, #tpu.memory_space<vmem>>, vector<1x1x64xf32>
    %15 = vector.shape_cast %14 : vector<1x1x64xf32> to vector<1x64xf32>
    %16 = vector.broadcast %15 : vector<1x64xf32> to vector<16x64xf32>
    %17 = arith.addf %13, %16 : vector<16x64xf32>
    %cst_14 = arith.constant 0.000000e+00 : f32
    %18 = vector.broadcast %cst_14 : f32 to vector<16x64xf32>
    %19 = arith.maximumf %17, %18 : vector<16x64xf32>
    %c0_15 = arith.constant 0 : index
    %c0_16 = arith.constant 0 : index
    %c0_17 = arith.constant 0 : index
    %20 = vector.load %arg6[%c0_15, %c0_16, %c0_17] : memref<1x64x32xf32, #tpu.memory_space<vmem>>, vector<1x64x32xf32>
    %21 = vector.shape_cast %20 : vector<1x64x32xf32> to vector<64x32xf32>
    %cst_18 = arith.constant dense<0.000000e+00> : vector<16x32xf32>
    %22 = tpu.matmul %19, %21, %cst_18 {dimension_numbers = #tpu.dot_dimension_numbers<[1], [0], [0], [1], [0, 0, 1, 1], [], []>} : vector<16x64xf32>, vector<64x32xf32>, vector<16x32xf32> -> vector<16x32xf32>
    %c0_19 = arith.constant 0 : index
    %c0_20 = arith.constant 0 : index
    %c0_21 = arith.constant 0 : index
    %23 = vector.load %arg7[%c0_19, %c0_20, %c0_21] : memref<1x1x32xf32, #tpu.memory_space<vmem>>, vector<1x1x32xf32>
    %24 = vector.shape_cast %23 : vector<1x1x32xf32> to vector<1x32xf32>
    %25 = vector.broadcast %24 : vector<1x32xf32> to vector<16x32xf32>
    %26 = arith.addf %22, %25 : vector<16x32xf32>
    %cst_22 = arith.constant dense<0.000000e+00> : vector<32xf32>
    %27 = vector.multi_reduction <add>, %26, %cst_22 [0] : vector<16x32xf32> to vector<32xf32>
    %28 = vector.shape_cast %27 : vector<32xf32> to vector<1x32xf32>
    %cst_23 = arith.constant 1.600000e+01 : f32
    %29 = vector.broadcast %cst_23 : f32 to vector<1x32xf32>
    %30 = arith.divf %28, %29 : vector<1x32xf32>
    %31 = vector.broadcast %30 : vector<1x32xf32> to vector<16x32xf32>
    %32 = arith.subf %26, %31 : vector<16x32xf32>
    %33 = arith.mulf %32, %32 : vector<16x32xf32>
    %cst_24 = arith.constant dense<0.000000e+00> : vector<32xf32>
    %34 = vector.multi_reduction <add>, %33, %cst_24 [0] : vector<16x32xf32> to vector<32xf32>
    %35 = vector.shape_cast %34 : vector<32xf32> to vector<1x32xf32>
    %cst_25 = arith.constant 1.600000e+01 : f32
    %36 = vector.broadcast %cst_25 : f32 to vector<1x32xf32>
    %37 = arith.divf %35, %36 : vector<1x32xf32>
    %38 = vector.broadcast %30 : vector<1x32xf32> to vector<16x32xf32>
    %39 = arith.subf %26, %38 : vector<16x32xf32>
    %cst_26 = arith.constant 9.99999974E-6 : f32
    %40 = vector.broadcast %cst_26 : f32 to vector<1x32xf32>
    %41 = arith.addf %37, %40 : vector<1x32xf32>
    %42 = math.rsqrt %41 : vector<1x32xf32>
    %43 = vector.broadcast %42 : vector<1x32xf32> to vector<16x32xf32>
    %44 = arith.mulf %39, %43 : vector<16x32xf32>
    %c0_27 = arith.constant 0 : index
    %c0_28 = arith.constant 0 : index
    %c0_29 = arith.constant 0 : index
    %45 = vector.load %arg8[%c0_27, %c0_28, %c0_29] : memref<1x1x32xf32, #tpu.memory_space<vmem>>, vector<1x1x32xf32>
    %46 = vector.shape_cast %45 : vector<1x1x32xf32> to vector<1x32xf32>
    %47 = vector.broadcast %46 : vector<1x32xf32> to vector<16x32xf32>
    %48 = arith.mulf %44, %47 : vector<16x32xf32>
    %c0_30 = arith.constant 0 : index
    %c0_31 = arith.constant 0 : index
    %c0_32 = arith.constant 0 : index
    %49 = vector.load %arg9[%c0_30, %c0_31, %c0_32] : memref<1x1x32xf32, #tpu.memory_space<vmem>>, vector<1x1x32xf32>
    %50 = vector.shape_cast %49 : vector<1x1x32xf32> to vector<1x32xf32>
    %51 = vector.broadcast %50 : vector<1x32xf32> to vector<16x32xf32>
    %52 = arith.addf %48, %51 : vector<16x32xf32>
    %c0_33 = arith.constant 0 : index
    %c0_34 = arith.constant 0 : index
    %53 = vector.load %arg11[%c0_33, %c0_34] : memref<16x32xf32, #tpu.memory_space<vmem>>, vector<16x32xf32>
    tpu.vector_store %arg11[%c0_33, %c0_34], %52 {strides = array<i32>} : memref<16x32xf32, #tpu.memory_space<vmem>>, vector<16x32xf32>,
    %true = arith.constant true
    %54 = arith.xori %0, %true : i1
    %55 = arith.extui %54 : i1 to i32
    %c0_i32_35 = arith.constant 0 : i32
    %56 = arith.cmpi ne, %55, %c0_i32_35 : i32
    scf.if %56 {
      %cst_37 = arith.constant 0.000000e+00 : f32
      %59 = vector.broadcast %cst_37 : f32 to vector<16x32xf32>
      %60 = arith.maximumf %52, %59 : vector<16x32xf32>
      %c0_38 = arith.constant 0 : index
      %c0_39 = arith.constant 0 : index
      %61 = vector.load %arg11[%c0_38, %c0_39] : memref<16x32xf32, #tpu.memory_space<vmem>>, vector<16x32xf32>
      tpu.vector_store %arg11[%c0_38, %c0_39], %60 {strides = array<i32>} : memref<16x32xf32, #tpu.memory_space<vmem>>, vector<16x32xf32>,
    } else {
    }
    %57 = arith.extui %0 : i1 to i32
    %c0_i32_36 = arith.constant 0 : i32
    %58 = arith.cmpi ne, %57, %c0_i32_36 : i32
    scf.if %58 {
      %c0_37 = arith.constant 0 : index
      %c0_38 = arith.constant 0 : index
      %59 = vector.load %arg10[%c0_37, %c0_38] : memref<16x32xf32, #tpu.memory_space<vmem>>, vector<16x32xf32>
      tpu.vector_store %arg10[%c0_37, %c0_38], %52 {strides = array<i32>} : memref<16x32xf32, #tpu.memory_space<vmem>>, vector<16x32xf32>,
    } else {
    }
    return
  }
  func.func @transform_0(%arg0: i32) -> (i32, i32) {
    %c0_i32 = arith.constant 0 : i32
    %c0_i32_0 = arith.constant 0 : i32
    %c0_i32_1 = arith.constant 0 : i32
    return %c0_i32, %c0_i32_0 : i32, i32
  }
  func.func @transform_1(%arg0: i32) -> (i32, i32) {
    %c0_i32 = arith.constant 0 : i32
    %c0_i32_0 = arith.constant 0 : i32
    %c0_i32_1 = arith.constant 0 : i32
    return %c0_i32, %c0_i32_0 : i32, i32
  }
  func.func @transform_2(%arg0: i32) -> (i32, i32, i32) {
    %c0_i32 = arith.constant 0 : i32
    %c0_i32_0 = arith.constant 0 : i32
    %c0_i32_1 = arith.constant 0 : i32
    return %arg0, %c0_i32, %c0_i32_0 : i32, i32, i32
  }
  func.func @transform_3(%arg0: i32) -> (i32, i32, i32) {
    %c0_i32 = arith.constant 0 : i32
    %c0_i32_0 = arith.constant 0 : i32
    %c0_i32_1 = arith.constant 0 : i32
    return %arg0, %c0_i32, %c0_i32_0 : i32, i32, i32
  }
  func.func @transform_4(%arg0: i32) -> (i32, i32, i32) {
    %c0_i32 = arith.constant 0 : i32
    %c0_i32_0 = arith.constant 0 : i32
    %c0_i32_1 = arith.constant 0 : i32
    return %arg0, %c0_i32, %c0_i32_0 : i32, i32, i32
  }
  func.func @transform_5(%arg0: i32) -> (i32, i32, i32) {
    %c0_i32 = arith.constant 0 : i32
    %c0_i32_0 = arith.constant 0 : i32
    %c0_i32_1 = arith.constant 0 : i32
    return %arg0, %c0_i32, %c0_i32_0 : i32, i32, i32
  }
  func.func @transform_6(%arg0: i32) -> (i32, i32, i32) {
    %c0_i32 = arith.constant 0 : i32
    %c0_i32_0 = arith.constant 0 : i32
    %c0_i32_1 = arith.constant 0 : i32
    return %arg0, %c0_i32, %c0_i32_0 : i32, i32, i32
  }
  func.func @transform_7(%arg0: i32) -> (i32, i32, i32) {
    %c0_i32 = arith.constant 0 : i32
    %c0_i32_0 = arith.constant 0 : i32
    %c0_i32_1 = arith.constant 0 : i32
    return %arg0, %c0_i32, %c0_i32_0 : i32, i32, i32
  }
  func.func @transform_8(%arg0: i32) -> (i32, i32, i32) {
    %c0_i32 = arith.constant 0 : i32
    %c0_i32_0 = arith.constant 0 : i32
    %c0_i32_1 = arith.constant 0 : i32
    return %arg0, %c0_i32, %c0_i32_0 : i32, i32, i32
  }
  func.func @transform_9(%arg0: i32) -> (i32, i32) {
    %c0_i32 = arith.constant 0 : i32
    %c0_i32_0 = arith.constant 0 : i32
    %c0_i32_1 = arith.constant 0 : i32
    return %c0_i32, %c0_i32_0 : i32, i32
  }
}

</mosaic_0001>

<llo_original>
// kernel: tpu_custom_call.1
$region0: #{tpu_custom_call.1}
  #allocation0 [shape = 'u32[]', space=smem, size = 0x4, offset = 0x4, fixed_abs, tag = 'smem constant byte address 0x4 - core index']
  #allocation1 [shape = 'u32[144,128]{1,0:T(1,128)}', space=vmem, size = 0x12000, scoped, tag = 'internal scratch']
  #allocation2 [shape = 'f32[16,32]{1,0:T(8,128)}', space=vmem, size = 0x2000, scoped, tag = 'scratch operand']
  %s0 = inlined_call_operand.vmem [shape: f32[16,32], index: 0, kind: input, shape index: {}]
  %s1 = inlined_call_operand.vmem [shape: bf16[16,16], index: 1, kind: input, shape index: {}]
  %s2 = inlined_call_operand.vmem [shape: f32[5,16,32], index: 2, kind: input, shape index: {}]
  %s3 = inlined_call_operand.vmem [shape: f32[5,32,64], index: 3, kind: input, shape index: {}]
  %s4 = inlined_call_operand.vmem [shape: f32[5,1,64], index: 4, kind: input, shape index: {}]
  %s5 = inlined_call_operand.vmem [shape: f32[5,64,32], index: 5, kind: input, shape index: {}]
  %s6 = inlined_call_operand.vmem [shape: f32[5,1,32], index: 6, kind: input, shape index: {}]
  %s7 = inlined_call_operand.vmem [shape: f32[5,1,32], index: 7, kind: input, shape index: {}]
  %s8 = inlined_call_operand.vmem [shape: f32[5,1,32], index: 8, kind: input, shape index: {}]
  %s9 = inlined_call_operand.hbm [shape: f32[16,32], index: 9, kind: output, shape index: {}]
  %s10 = sld [smem:[#allocation0]]
  $region81: #{tpu_custom_call.1} parent=0
    _
  %s12 = ssub.s32 1, %s10
  %s13 = scalar_select 0, %s12, %s10
  $region1: #{tpu_custom_call.1} parent=0
    #allocation3 [shape = 'u8[8192]{0}', space=vmem, size = 0x2000, scoped, tag = 'output window, operand 0, single buffered']
    #allocation4 [shape = 's32[2]{0}', space=sflag, size = 0x8, scoped, tag = 'scoped memory for tpu_custom_call.1']
    %14 = vsyncpa [#allocation4], 0
    loop: start=0, step=1, limit=7
    $region2: #{tpu_custom_call.1} parent=1 // loop_pre_header
      _
    $region3: #{tpu_custom_call.1} parent=1 // loop_header
      %s16 = sphi 0, %s20
      %p17 = scmp.ge.s32.totalorder %s16, 7
      %s24 = sphi 0, %s24
      %s26 = sphi 0, %s24
      %s27 = sphi 0, %s26
      %s41 = sphi 0, %s27
      %s45 = sphi 0, %s45
      %s47 = sphi 0, %s45
      %s48 = sphi 0, %s47
      %s62 = sphi 0, %s48
      %s68 = sphi 0, %s70
      %s71 = sphi 0, %s68
      %s72 = sphi 0, %s71
      %s88 = sphi 0, %s72
      %s94 = sphi 0, %s96
      %s97 = sphi 0, %s94
      %s98 = sphi 0, %s97
      %s114 = sphi 0, %s98
      %s120 = sphi 0, %s122
      %s123 = sphi 0, %s120
      %s124 = sphi 0, %s123
      %s140 = sphi 0, %s124
      %s146 = sphi 0, %s148
      %s149 = sphi 0, %s146
      %s150 = sphi 0, %s149
      %s166 = sphi 0, %s150
      %s172 = sphi 0, %s174
      %s175 = sphi 0, %s172
      %s176 = sphi 0, %s175
      %s192 = sphi 0, %s176
      %s198 = sphi 0, %s200
      %s201 = sphi 0, %s198
      %s202 = sphi 0, %s201
      %s218 = sphi 0, %s202
      %s224 = sphi 0, %s226
      %s227 = sphi 0, %s224
      %s228 = sphi 0, %s227
      %s244 = sphi 0, %s228
      %s248 = sphi 0, %s248
      %s250 = sphi 0, %s248
      %s251 = sphi 0, %s250
      %s265 = sphi 0, %s251
    $region4: #{tpu_custom_call.1} parent=1 // loop_header_branch
      %19 = sbr.rel (%p17) target = $region8
    $region5: #{tpu_custom_call.1} parent=1 // loop_body
      %s21 = ssub.s32 %s16, 1
      %s22 = ssub.s32 %s16, 2
      %s23 = sadd.s32 %s16, 1
      %s25 = sadd.s32 %s24, 1
      %p28 = scmp.eq.s32.totalorder %s16, 4
      %p29 = scmp.ne.s32.totalorder %s24, %s26
      %p30 = scmp.eq.s32.totalorder %s16, 0
      %p31 = por %p29, %p30
      %p32 = scmp.ne.s32.totalorder %s24, %s26
      %p33 = scmp.eq.s32.totalorder %s21, 4
      %p34 = por %p32, %p33
      %p35 = scmp.ne.s32.totalorder %s26, %s27
      %p36 = scmp.eq.s32.totalorder %s21, 0
      %p37 = por %p35, %p36
      %p38 = scmp.ne.s32.totalorder %s26, %s27
      %p39 = scmp.eq.s32.totalorder %s22, 4
      %p40 = por %p38, %p39
      %p42 = scmp.ne.s32.totalorder %s27, %s41
      %p43 = scmp.eq.s32.totalorder %s22, 0
      %p44 = por %p42, %p43
      %s46 = sadd.s32 %s45, 1
      %p49 = scmp.eq.s32.totalorder %s16, 4
      %p50 = scmp.ne.s32.totalorder %s45, %s47
      %p51 = scmp.eq.s32.totalorder %s16, 0
      %p52 = por %p50, %p51
      %p53 = scmp.ne.s32.totalorder %s45, %s47
      %p54 = scmp.eq.s32.totalorder %s21, 4
      %p55 = por %p53, %p54
      %p56 = scmp.ne.s32.totalorder %s47, %s48
      %p57 = scmp.eq.s32.totalorder %s21, 0
      %p58 = por %p56, %p57
      %p59 = scmp.ne.s32.totalorder %s47, %s48
      %p60 = scmp.eq.s32.totalorder %s22, 4
      %p61 = por %p59, %p60
      %p63 = scmp.ne.s32.totalorder %s48, %s62
      %p64 = scmp.eq.s32.totalorder %s22, 0
      %p65 = por %p63, %p64
      %s66 = ssub.s32 %s16, %s23
      %p67 = scmp.eq.s32.totalorder %s66, 0
      %s69 = sadd.s32 %s68, 1
      %s70 = scalar_select %p67, %s68, %s69
      %p73 = pneg %p67
      %p74 = scmp.eq.s32.totalorder %s16, 4
      %p75 = por %p73, %p74
      %p76 = scmp.ne.s32.totalorder %s68, %s71
      %p77 = scmp.eq.s32.totalorder %s16, 0
      %p78 = por %p76, %p77
      %p79 = scmp.ne.s32.totalorder %s68, %s71
      %p80 = scmp.eq.s32.totalorder %s21, 4
      %p81 = por %p79, %p80
      %p82 = scmp.ne.s32.totalorder %s71, %s72
      %p83 = scmp.eq.s32.totalorder %s21, 0
      %p84 = por %p82, %p83
      %p85 = scmp.ne.s32.totalorder %s71, %s72
      %p86 = scmp.eq.s32.totalorder %s22, 4
      %p87 = por %p85, %p86
      %p89 = scmp.ne.s32.totalorder %s72, %s88
      %p90 = scmp.eq.s32.totalorder %s22, 0
      %p91 = por %p89, %p90
      %s92 = ssub.s32 %s16, %s23
      %p93 = scmp.eq.s32.totalorder %s92, 0
      %s95 = sadd.s32 %s94, 1
      %s96 = scalar_select %p93, %s94, %s95
      %p99 = pneg %p93
      %p100 = scmp.eq.s32.totalorder %s16, 4
      %p101 = por %p99, %p100
      %p102 = scmp.ne.s32.totalorder %s94, %s97
      %p103 = scmp.eq.s32.totalorder %s16, 0
      %p104 = por %p102, %p103
      %p105 = scmp.ne.s32.totalorder %s94, %s97
      %p106 = scmp.eq.s32.totalorder %s21, 4
      %p107 = por %p105, %p106
      %p108 = scmp.ne.s32.totalorder %s97, %s98
      %p109 = scmp.eq.s32.totalorder %s21, 0
      %p110 = por %p108, %p109
      %p111 = scmp.ne.s32.totalorder %s97, %s98
      %p112 = scmp.eq.s32.totalorder %s22, 4
      %p113 = por %p111, %p112
      %p115 = scmp.ne.s32.totalorder %s98, %s114
      %p116 = scmp.eq.s32.totalorder %s22, 0
      %p117 = por %p115, %p116
      %s118 = ssub.s32 %s16, %s23
      %p119 = scmp.eq.s32.totalorder %s118, 0
      %s121 = sadd.s32 %s120, 1
      %s122 = scalar_select %p119, %s120, %s121
      %p125 = pneg %p119
      %p126 = scmp.eq.s32.totalorder %s16, 4
      %p127 = por %p125, %p126
      %p128 = scmp.ne.s32.totalorder %s120, %s123
      %p129 = scmp.eq.s32.totalorder %s16, 0
      %p130 = por %p128, %p129
      %p131 = scmp.ne.s32.totalorder %s120, %s123
      %p132 = scmp.eq.s32.totalorder %s21, 4
      %p133 = por %p131, %p132
      %p134 = scmp.ne.s32.totalorder %s123, %s124
      %p135 = scmp.eq.s32.totalorder %s21, 0
      %p136 = por %p134, %p135
      %p137 = scmp.ne.s32.totalorder %s123, %s124
      %p138 = scmp.eq.s32.totalorder %s22, 4
      %p139 = por %p137, %p138
      %p141 = scmp.ne.s32.totalorder %s124, %s140
      %p142 = scmp.eq.s32.totalorder %s22, 0
      %p143 = por %p141, %p142
      %s144 = ssub.s32 %s16, %s23
      %p145 = scmp.eq.s32.totalorder %s144, 0
      %s147 = sadd.s32 %s146, 1
      %s148 = scalar_select %p145, %s146, %s147
      %p151 = pneg %p145
      %p152 = scmp.eq.s32.totalorder %s16, 4
      %p153 = por %p151, %p152
      %p154 = scmp.ne.s32.totalorder %s146, %s149
      %p155 = scmp.eq.s32.totalorder %s16, 0
      %p156 = por %p154, %p155
      %p157 = scmp.ne.s32.totalorder %s146, %s149
      %p158 = scmp.eq.s32.totalorder %s21, 4
      %p159 = por %p157, %p158
      %p160 = scmp.ne.s32.totalorder %s149, %s150
      %p161 = scmp.eq.s32.totalorder %s21, 0
      %p162 = por %p160, %p161
      %p163 = scmp.ne.s32.totalorder %s149, %s150
      %p164 = scmp.eq.s32.totalorder %s22, 4
      %p165 = por %p163, %p164
      %p167 = scmp.ne.s32.totalorder %s150, %s166
      %p168 = scmp.eq.s32.totalorder %s22, 0
      %p169 = por %p167, %p168
      %s170 = ssub.s32 %s16, %s23
      %p171 = scmp.eq.s32.totalorder %s170, 0
      %s173 = sadd.s32 %s172, 1
      %s174 = scalar_select %p171, %s172, %s173
      %p177 = pneg %p171
      %p178 = scmp.eq.s32.totalorder %s16, 4
      %p179 = por %p177, %p178
      %p180 = scmp.ne.s32.totalorder %s172, %s175
      %p181 = scmp.eq.s32.totalorder %s16, 0
      %p182 = por %p180, %p181
      %p183 = scmp.ne.s32.totalorder %s172, %s175
      %p184 = scmp.eq.s32.totalorder %s21, 4
      %p185 = por %p183, %p184
      %p186 = scmp.ne.s32.totalorder %s175, %s176
      %p187 = scmp.eq.s32.totalorder %s21, 0
      %p188 = por %p186, %p187
      %p189 = scmp.ne.s32.totalorder %s175, %s176
      %p190 = scmp.eq.s32.totalorder %s22, 4
      %p191 = por %p189, %p190
      %p193 = scmp.ne.s32.totalorder %s176, %s192
      %p194 = scmp.eq.s32.totalorder %s22, 0
      %p195 = por %p193, %p194
      %s196 = ssub.s32 %s16, %s23
      %p197 = scmp.eq.s32.totalorder %s196, 0
      %s199 = sadd.s32 %s198, 1
      %s200 = scalar_select %p197, %s198, %s199
      %p203 = pneg %p197
      %p204 = scmp.eq.s32.totalorder %s16, 4
      %p205 = por %p203, %p204
      %p206 = scmp.ne.s32.totalorder %s198, %s201
      %p207 = scmp.eq.s32.totalorder %s16, 0
      %p208 = por %p206, %p207
      %p209 = scmp.ne.s32.totalorder %s198, %s201
      %p210 = scmp.eq.s32.totalorder %s21, 4
      %p211 = por %p209, %p210
      %p212 = scmp.ne.s32.totalorder %s201, %s202
      %p213 = scmp.eq.s32.totalorder %s21, 0
      %p214 = por %p212, %p213
      %p215 = scmp.ne.s32.totalorder %s201, %s202
      %p216 = scmp.eq.s32.totalorder %s22, 4
      %p217 = por %p215, %p216
      %p219 = scmp.ne.s32.totalorder %s202, %s218
      %p220 = scmp.eq.s32.totalorder %s22, 0
      %p221 = por %p219, %p220
      %s222 = ssub.s32 %s16, %s23
      %p223 = scmp.eq.s32.totalorder %s222, 0
      %s225 = sadd.s32 %s224, 1
      %s226 = scalar_select %p223, %s224, %s225
      %p229 = pneg %p223
      %p230 = scmp.eq.s32.totalorder %s16, 4
      %p231 = por %p229, %p230
      %p232 = scmp.ne.s32.totalorder %s224, %s227
      %p233 = scmp.eq.s32.totalorder %s16, 0
      %p234 = por %p232, %p233
      %p235 = scmp.ne.s32.totalorder %s224, %s227
      %p236 = scmp.eq.s32.totalorder %s21, 4
      %p237 = por %p235, %p236
      %p238 = scmp.ne.s32.totalorder %s227, %s228
      %p239 = scmp.eq.s32.totalorder %s21, 0
      %p240 = por %p238, %p239
      %p241 = scmp.ne.s32.totalorder %s227, %s228
      %p242 = scmp.eq.s32.totalorder %s22, 4
      %p243 = por %p241, %p242
      %p245 = scmp.ne.s32.totalorder %s228, %s244
      %p246 = scmp.eq.s32.totalorder %s22, 0
      %p247 = por %p245, %p246
      %s249 = sadd.s32 %s248, 1
      %p252 = scmp.eq.s32.totalorder %s16, 4
      %p253 = scmp.ne.s32.totalorder %s248, %s250
      %p254 = scmp.eq.s32.totalorder %s16, 0
      %p255 = por %p253, %p254
      %p256 = scmp.ne.s32.totalorder %s248, %s250
      %p257 = scmp.eq.s32.totalorder %s21, 4
      %p258 = por %p256, %p257
      %p259 = scmp.ne.s32.totalorder %s250, %s251
      %p260 = scmp.eq.s32.totalorder %s21, 0
      %p261 = por %p259, %p260
      %p262 = scmp.ne.s32.totalorder %s250, %s251
      %p263 = scmp.eq.s32.totalorder %s22, 4
      %p264 = por %p262, %p263
      %p266 = scmp.ne.s32.totalorder %s251, %s265
      %p267 = scmp.eq.s32.totalorder %s22, 0
      %p268 = por %p266, %p267
      %p269 = scmp.le.s32.totalorder 1, %s16
      %p270 = scmp.lt.s32.totalorder %s16, 6
      %p271 = pnand %p269, %p270
      %p272 = pneg %p271
      // Predicated region
      $region9: #{tpu_custom_call.1} parent=5 // pred_check
        _
      $region10: #{tpu_custom_call.1} parent=5 // pred_check_branch
        %274 = sbr.rel (%p271) target = $region12
      $region11: #{tpu_custom_call.1} parent=5 // pred_region
        %s275 = ssub.s32 %s16, 1
        // Predicated region
        $region13: #{tpu_custom_call.1} parent=11 // pred_check
          %p276 = pneg %p37
        $region14: #{tpu_custom_call.1} parent=11 // pred_check_branch
          %278 = sbr.rel (%p276) target = $region16
        $region15: #{tpu_custom_call.1} parent=11 // pred_region
          _
        $region16: #{tpu_custom_call.1} parent=11 // pred_fallthru
          _
        // Predicated region
        $region17: #{tpu_custom_call.1} parent=11 // pred_check
          %p279 = pneg %p58
        $region18: #{tpu_custom_call.1} parent=11 // pred_check_branch
          %281 = sbr.rel (%p279) target = $region20
        $region19: #{tpu_custom_call.1} parent=11 // pred_region
          _
        $region20: #{tpu_custom_call.1} parent=11 // pred_fallthru
          _
      $region12: #{tpu_custom_call.1} parent=5 // pred_fallthru
        _
      %p282 = scmp.lt.s32.totalorder %s16, 5
      // Predicated region
      $region21: #{tpu_custom_call.1} parent=5 // pred_check
        %p283 = pneg %p282
      $region22: #{tpu_custom_call.1} parent=5 // pred_check_branch
        %285 = sbr.rel (%p283) target = $region24
      $region23: #{tpu_custom_call.1} parent=5 // pred_region
        // Predicated region
        $region25: #{tpu_custom_call.1} parent=23 // pred_check
          %p286 = pneg %p78
        $region26: #{tpu_custom_call.1} parent=23 // pred_check_branch
          %288 = sbr.rel (%p286) target = $region28
        $region27: #{tpu_custom_call.1} parent=23 // pred_region
          %p289 = scmp.lt.s32.totalorder %s16, 4
          %s290 = scalar_select %p289, %s16, 4
          %s291 = smul.addr %s290, 2
          %s292 = smul.addr %s291, 8
          %s293 = scalar_lea.vmem %s2, %s292
        $region28: #{tpu_custom_call.1} parent=23 // pred_fallthru
          _
        // Predicated region
        $region29: #{tpu_custom_call.1} parent=23 // pred_check
          %p294 = pneg %p104
        $region30: #{tpu_custom_call.1} parent=23 // pred_check_branch
          %296 = sbr.rel (%p294) target = $region32
        $region31: #{tpu_custom_call.1} parent=23 // pred_region
          %p297 = scmp.lt.s32.totalorder %s16, 4
          %s298 = scalar_select %p297, %s16, 4
          %s299 = smul.addr %s298, 4
          %s300 = smul.addr %s299, 8
          %s301 = scalar_lea.vmem %s3, %s300
        $region32: #{tpu_custom_call.1} parent=23 // pred_fallthru
          _
        // Predicated region
        $region33: #{tpu_custom_call.1} parent=23 // pred_check
          %p302 = pneg %p130
        $region34: #{tpu_custom_call.1} parent=23 // pred_check_branch
          %304 = sbr.rel (%p302) target = $region36
        $region35: #{tpu_custom_call.1} parent=23 // pred_region
          %p305 = scmp.lt.s32.totalorder %s16, 4
          %s306 = scalar_select %p305, %s16, 4
          %s307 = scalar_lea.vmem %s4, %s306
        $region36: #{tpu_custom_call.1} parent=23 // pred_fallthru
          _
        // Predicated region
        $region37: #{tpu_custom_call.1} parent=23 // pred_check
          %p308 = pneg %p156
        $region38: #{tpu_custom_call.1} parent=23 // pred_check_branch
          %310 = sbr.rel (%p308) target = $region40
        $region39: #{tpu_custom_call.1} parent=23 // pred_region
          %p311 = scmp.lt.s32.totalorder %s16, 4
          %s312 = scalar_select %p311, %s16, 4
          %s313 = smul.addr %s312, 8
          %s314 = smul.addr %s313, 8
          %s315 = scalar_lea.vmem %s5, %s314
        $region40: #{tpu_custom_call.1} parent=23 // pred_fallthru
          _
        // Predicated region
        $region41: #{tpu_custom_call.1} parent=23 // pred_check
          %p316 = pneg %p182
        $region42: #{tpu_custom_call.1} parent=23 // pred_check_branch
          %318 = sbr.rel (%p316) target = $region44
        $region43: #{tpu_custom_call.1} parent=23 // pred_region
          %p319 = scmp.lt.s32.totalorder %s16, 4
          %s320 = scalar_select %p319, %s16, 4
          %s321 = scalar_lea.vmem %s6, %s320
        $region44: #{tpu_custom_call.1} parent=23 // pred_fallthru
          _
        // Predicated region
        $region45: #{tpu_custom_call.1} parent=23 // pred_check
          %p322 = pneg %p208
        $region46: #{tpu_custom_call.1} parent=23 // pred_check_branch
          %324 = sbr.rel (%p322) target = $region48
        $region47: #{tpu_custom_call.1} parent=23 // pred_region
          %p325 = scmp.lt.s32.totalorder %s16, 4
          %s326 = scalar_select %p325, %s16, 4
          %s327 = scalar_lea.vmem %s7, %s326
        $region48: #{tpu_custom_call.1} parent=23 // pred_fallthru
          _
        // Predicated region
        $region49: #{tpu_custom_call.1} parent=23 // pred_check
          %p328 = pneg %p234
        $region50: #{tpu_custom_call.1} parent=23 // pred_check_branch
          %330 = sbr.rel (%p328) target = $region52
        $region51: #{tpu_custom_call.1} parent=23 // pred_region
          %p331 = scmp.lt.s32.totalorder %s16, 4
          %s332 = scalar_select %p331, %s16, 4
          %s333 = scalar_lea.vmem %s8, %s332
        $region52: #{tpu_custom_call.1} parent=23 // pred_fallthru
          _
      $region24: #{tpu_custom_call.1} parent=5 // pred_fallthru
        _
      %p334 = scmp.le.s32.totalorder 1, %s16
      %p335 = scmp.lt.s32.totalorder %s16, 6
      %p336 = pnand %p334, %p335
      %p337 = pneg %p336
      // Predicated region
      $region53: #{tpu_custom_call.1} parent=5 // pred_check
        _
      $region54: #{tpu_custom_call.1} parent=5 // pred_check_branch
        %339 = sbr.rel (%p336) target = $region56
      $region55: #{tpu_custom_call.1} parent=5 // pred_region
        %s340 = ssub.s32 %s16, 1
        %p341 = pneg %p37
        %p342 = pneg %p34
        %p343 = pneg %p58
        %p344 = pneg %p55
        %p345 = scmp.lt.s32.totalorder %s21, 4
        %s346 = scalar_select %p345, %s21, 4
        %s347 = smul.addr %s346, 2
        %s348 = smul.addr %s347, 8
        %s349 = scalar_lea.vmem %s2, %s348
        %p350 = pneg %p84
        %p351 = pneg %p81
        %p352 = scmp.lt.s32.totalorder %s21, 4
        %s353 = scalar_select %p352, %s21, 4
        %s354 = smul.addr %s353, 4
        %s355 = smul.addr %s354, 8
        %s356 = scalar_lea.vmem %s3, %s355
        %p357 = pneg %p110
        %p358 = pneg %p107
        %p359 = scmp.lt.s32.totalorder %s21, 4
        %s360 = scalar_select %p359, %s21, 4
        %s361 = scalar_lea.vmem %s4, %s360
        %p362 = pneg %p136
        %p363 = pneg %p133
        %p364 = scmp.lt.s32.totalorder %s21, 4
        %s365 = scalar_select %p364, %s21, 4
        %s366 = smul.addr %s365, 8
        %s367 = smul.addr %s366, 8
        %s368 = scalar_lea.vmem %s5, %s367
        %p369 = pneg %p162
        %p370 = pneg %p159
        %p371 = scmp.lt.s32.totalorder %s21, 4
        %s372 = scalar_select %p371, %s21, 4
        %s373 = scalar_lea.vmem %s6, %s372
        %p374 = pneg %p188
        %p375 = pneg %p185
        %p376 = scmp.lt.s32.totalorder %s21, 4
        %s377 = scalar_select %p376, %s21, 4
        %s378 = scalar_lea.vmem %s7, %s377
        %p379 = pneg %p214
        %p380 = pneg %p211
        %p381 = scmp.lt.s32.totalorder %s21, 4
        %s382 = scalar_select %p381, %s21, 4
        %s383 = scalar_lea.vmem %s8, %s382
        %p384 = pneg %p240
        %p385 = pneg %p237
        %p386 = pneg %p261
        %p387 = pneg %p258
        %p388 = scmp.lt.s32.totalorder %s21, 4
        %s389 = scalar_select %p388, %s21, 4
        %s390 = smul.addr %s389, 2
        %s391 = smul.addr %s390, 8
        %s392 = scalar_lea.vmem %s2, %s391
        %p393 = scmp.lt.s32.totalorder %s21, 4
        %s394 = scalar_select %p393, %s21, 4
        %s395 = smul.addr %s394, 4
        %s396 = smul.addr %s395, 8
        %s397 = scalar_lea.vmem %s3, %s396
        %p398 = scmp.lt.s32.totalorder %s21, 4
        %s399 = scalar_select %p398, %s21, 4
        %s400 = scalar_lea.vmem %s4, %s399
        %p401 = scmp.lt.s32.totalorder %s21, 4
        %s402 = scalar_select %p401, %s21, 4
        %s403 = smul.addr %s402, 8
        %s404 = smul.addr %s403, 8
        %s405 = scalar_lea.vmem %s5, %s404
        %p406 = scmp.lt.s32.totalorder %s21, 4
        %s407 = scalar_select %p406, %s21, 4
        %s408 = scalar_lea.vmem %s6, %s407
        %p409 = scmp.lt.s32.totalorder %s21, 4
        %s410 = scalar_select %p409, %s21, 4
        %s411 = scalar_lea.vmem %s7, %s410
        %p412 = scmp.lt.s32.totalorder %s21, 4
        %s413 = scalar_select %p412, %s21, 4
        %s414 = scalar_lea.vmem %s8, %s413
        %p416 = scmp.eq.s32.totalorder %s21, 4
        %p417 = scmp.eq.s32.totalorder %s21, 0
        // Predicated region
        $region57: #{tpu_custom_call.1} parent=55 // pred_check
          %p418 = pneg %p417
        $region58: #{tpu_custom_call.1} parent=55 // pred_check_branch
          %420 = sbr.rel (%p418) target = $region60
        $region59: #{tpu_custom_call.1} parent=55 // pred_region
          %v421 = vld [vmem:[%s0] sm:$0xff]
          %v422 = vld [vmem:[%s0 + $0x8] sm:$0xff]
          %vm423 = vcmask 261120
          %424 = vst.msk [vmem:[#allocation2] sm:$0xff] %vm423, %v421
          %425 = vst.msk [vmem:[#allocation2 + $0x8] sm:$0xff] %vm423, %v422
        $region60: #{tpu_custom_call.1} parent=55 // pred_fallthru
          _
        %v426 = vld [vmem:[#allocation2] sm:$0xff]
        %v427 = vld [vmem:[#allocation2 + $0x8] sm:$0xff]
        %v428 = vld [vmem:[%s1] sm:$0xf]
        %v429 = vld [vmem:[%s1 + $0x4] sm:$0xf]
        %v430 = vpack.c.bf16 %v427, %v426
        %v431 = vld [vmem:[%s392] sm:$0xff]
        %v432 = vld [vmem:[%s392 + $0x8] sm:$0xff]
        %v435 = vunpack.c.l.b16 %v428
        %v436 = vunpack.c.l.b16 %v429
        %v437 = vpack.c.b16 %v436, %v435
        %vm438 = vcmask 130048
        %v440 = vsel %vm438, %v437, 0
        %442 = vmatprep.subr.bf16.mxu0 0
        %443 = vmatpush1.bf16.msra.mxu0 0
        %444 = vmatprep.subr.bf16.mxu0 0
        %445 = vmatpush1.bf16.msra.mxu0 0
        %446 = vmatprep.subr.bf16.mxu0 0
        %447 = vmatpush1.bf16.msra.mxu0 0
        %448 = vmatprep.subr.bf16.mxu0 0
        %449 = vmatpush1.bf16.msra.mxu0 0
        %450 = vmatprep.subr.bf16.mxu0 0
        %451 = vmatpush1.bf16.msra.mxu0 0
        %452 = vmatprep.subr.bf16.mxu0 0
        %453 = vmatpush1.bf16.msra.mxu0 0
        %454 = vmatprep.subr.bf16.mxu0 0
        %455 = vmatpush1.bf16.msra.mxu0 0
        %456 = vmatprep.subr.bf16.mxu0 0
        %457 = vmatpush1.bf16.msra.mxu0 %v430
        %458 = vmatprep.subr.bf16.mxu0 0
        %459 = vmatpush2.bf16.msra.mxu0 0
        %460 = vmatprep.subr.bf16.mxu0 0
        %461 = vmatpush2.bf16.msra.mxu0 0
        %462 = vmatprep.subr.bf16.mxu0 0
        %463 = vmatpush2.bf16.msra.mxu0 0
        %464 = vmatprep.subr.bf16.mxu0 0
        %465 = vmatpush2.bf16.msra.mxu0 0
        %466 = vmatprep.subr.bf16.mxu0 0
        %467 = vmatpush2.bf16.msra.mxu0 0
        %468 = vmatprep.subr.bf16.mxu0 0
        %469 = vmatpush2.bf16.msra.mxu0 0
        %470 = vmatprep.subr.bf16.mxu0 0
        %471 = vmatpush2.bf16.msra.mxu0 0
        %472 = vmatprep.subr.bf16.mxu0 0
        %473 = vmatpush2.bf16.msra.mxu0 0
        %474 = vmatprep.mubr.bf16.mxu0 0
        %475 = vmatmul.mubr.bf16.gmra.mxu0 %v440
        %v476 = vpop.f32.mrf.mxu0
        %v477 = vadd.f32 %v431, %v476
        %v478 = vpop.f32.mrf.mxu0
        %v479 = vpop.f32.mrf.mxu0
        %v480 = vadd.f32 %v432, %v479
        %v481 = vpop.f32.mrf.mxu0
        %482 = vdwg.mxu0
        %v483 = vld [vmem:[%s397] sm:$0xff]
        %v484 = vld [vmem:[%s397 + $0x8] sm:$0xff]
        %v485 = vld [vmem:[%s397 + $0x10] sm:$0xff]
        %v486 = vld [vmem:[%s397 + $0x18] sm:$0xff]
        %v487 = vld [vmem:[%s400] sm:$0x1]
        %v489 = vlaneseq
        %v490 = vshrl.u32 %v489, 7
        %v491 = vsub.s32 0, %v490
        %v492 = vrot.slane %v487, %v491
        %vm494 = vcmask 261120
        %v496 = vsel %vm494, %v477, 0
        %v499 = vsel %vm494, %v480, 0
        %501 = vmatprep.subr.mxu0 0.0
        %502 = vmatpush1.msra.mxu0 0.0
        %503 = vmatprep.subr.mxu0 0.0
        %504 = vmatpush1.msra.mxu0 0.0
        %505 = vmatprep.subr.mxu0 0.0
        %506 = vmatpush1.msra.mxu0 0.0
        %507 = vmatprep.subr.mxu0 0.0
        %508 = vmatpush1.msra.mxu0 0.0
        %509 = vmatprep.subr.mxu0 0.0
        %510 = vmatpush1.msra.mxu0 0.0
        %511 = vmatprep.subr.mxu0 0.0
        %512 = vmatpush1.msra.mxu0 0.0
        %513 = vmatprep.subr.mxu0 0.0
        %514 = vmatpush1.msra.mxu0 0.0
        %515 = vmatprep.subr.mxu0 0.0
        %516 = vmatpush1.msra.mxu0 0.0
        %517 = vmatprep.subr.mxu0 0.0
        %518 = vmatpush1.msra.mxu0 0.0
        %519 = vmatprep.subr.mxu0 0.0
        %520 = vmatpush1.msra.mxu0 0.0
        %521 = vmatprep.subr.mxu0 0.0
        %522 = vmatpush1.msra.mxu0 0.0
        %523 = vmatprep.subr.mxu0 0.0
        %524 = vmatpush1.msra.mxu0 0.0
        %525 = vmatprep.subr.mxu0 0.0
        %526 = vmatpush1.msra.mxu0 %v486
        %527 = vmatprep.subr.mxu0 0.0
        %528 = vmatpush1.msra.mxu0 %v485
        %529 = vmatprep.subr.mxu0 0.0
        %530 = vmatpush1.msra.mxu0 %v484
        %531 = vmatprep.subr.mxu0 0.0
        %532 = vmatpush1.msra.mxu0 %v483
        %533 = vmatprep.subr.mxu0 0.0
        %534 = vmatpush2.msra.mxu0 0.0
        %535 = vmatprep.subr.mxu0 0.0
        %536 = vmatpush2.msra.mxu0 0.0
        %537 = vmatprep.subr.mxu0 0.0
        %538 = vmatpush2.msra.mxu0 0.0
        %539 = vmatprep.subr.mxu0 0.0
        %540 = vmatpush2.msra.mxu0 0.0
        %541 = vmatprep.subr.mxu0 0.0
        %542 = vmatpush2.msra.mxu0 0.0
        %543 = vmatprep.subr.mxu0 0.0
        %544 = vmatpush2.msra.mxu0 0.0
        %545 = vmatprep.subr.mxu0 0.0
        %546 = vmatpush2.msra.mxu0 0.0
        %547 = vmatprep.subr.mxu0 0.0
        %548 = vmatpush2.msra.mxu0 0.0
        %549 = vmatprep.subr.mxu0 0.0
        %550 = vmatpush2.msra.mxu0 0.0
        %551 = vmatprep.subr.mxu0 0.0
        %552 = vmatpush2.msra.mxu0 0.0
        %553 = vmatprep.subr.mxu0 0.0
        %554 = vmatpush2.msra.mxu0 0.0
        %555 = vmatprep.subr.mxu0 0.0
        %556 = vmatpush2.msra.mxu0 0.0
        %557 = vmatprep.subr.mxu0 0.0
        %558 = vmatpush2.msra.mxu0 0.0
        %559 = vmatprep.subr.mxu0 0.0
        %560 = vmatpush2.msra.mxu0 0.0
        %561 = vmatprep.subr.mxu0 0.0
        %562 = vmatpush2.msra.mxu0 0.0
        %563 = vmatprep.subr.mxu0 0.0
        %564 = vmatpush2.msra.mxu0 0.0
        %565 = vmatprep.mubr.f32.mxu0 0.0
        %566 = vmatmul.mubr.f32.gmra.mxu0 %v496
        %v567 = vpop.f32.mrf.mxu0
        %v568 = vadd.f32 %v492, %v567
        %v569 = vpop.f32.mrf.mxu0
        %570 = vmatprep.mubr.f32.mxu0 0.0
        %571 = vmatmul.mubr.f32.gmra.mxu0 %v499
        %v572 = vpop.f32.mrf.mxu0
        %v573 = vadd.f32 %v492, %v572
        %v574 = vpop.f32.mrf.mxu0
        %575 = vdwg.mxu0
        %v576 = vmax.f32 %v568, 0.0
        %v577 = vmax.f32 %v573, 0.0
        %v578 = vld [vmem:[%s405] sm:$0xff]
        %v579 = vld [vmem:[%s405 + $0x8] sm:$0xff]
        %v580 = vld [vmem:[%s405 + $0x10] sm:$0xff]
        %v581 = vld [vmem:[%s405 + $0x18] sm:$0xff]
        %v582 = vld [vmem:[%s405 + $0x20] sm:$0xff]
        %v583 = vld [vmem:[%s405 + $0x28] sm:$0xff]
        %v584 = vld [vmem:[%s405 + $0x30] sm:$0xff]
        %v585 = vld [vmem:[%s405 + $0x38] sm:$0xff]
        %v586 = vld [vmem:[%s408] sm:$0x1]
        %v588 = vlaneseq
        %v589 = vshrl.u32 %v588, 7
        %v590 = vsub.s32 0, %v589
        %v591 = vrot.slane %v586, %v590
        %vm593 = vcmask 523264
        %v595 = vsel %vm593, %v576, 0
        %v598 = vsel %vm593, %v577, 0
        %600 = vmatprep.subr.mxu0 0.0
        %601 = vmatpush1.msra.mxu0 0.0
        %602 = vmatprep.subr.mxu0 0.0
        %603 = vmatpush1.msra.mxu0 0.0
        %604 = vmatprep.subr.mxu0 0.0
        %605 = vmatpush1.msra.mxu0 0.0
        %606 = vmatprep.subr.mxu0 0.0
        %607 = vmatpush1.msra.mxu0 0.0
        %608 = vmatprep.subr.mxu0 0.0
        %609 = vmatpush1.msra.mxu0 0.0
        %610 = vmatprep.subr.mxu0 0.0
        %611 = vmatpush1.msra.mxu0 0.0
        %612 = vmatprep.subr.mxu0 0.0
        %613 = vmatpush1.msra.mxu0 0.0
        %614 = vmatprep.subr.mxu0 0.0
        %615 = vmatpush1.msra.mxu0 0.0
        %616 = vmatprep.subr.mxu0 0.0
        %617 = vmatpush1.msra.mxu0 %v585
        %618 = vmatprep.subr.mxu0 0.0
        %619 = vmatpush1.msra.mxu0 %v584
        %620 = vmatprep.subr.mxu0 0.0
        %621 = vmatpush1.msra.mxu0 %v583
        %622 = vmatprep.subr.mxu0 0.0
        %623 = vmatpush1.msra.mxu0 %v582
        %624 = vmatprep.subr.mxu0 0.0
        %625 = vmatpush1.msra.mxu0 %v581
        %626 = vmatprep.subr.mxu0 0.0
        %627 = vmatpush1.msra.mxu0 %v580
        %628 = vmatprep.subr.mxu0 0.0
        %629 = vmatpush1.msra.mxu0 %v579
        %630 = vmatprep.subr.mxu0 0.0
        %631 = vmatpush1.msra.mxu0 %v578
        %632 = vmatprep.subr.mxu0 0.0
        %633 = vmatpush2.msra.mxu0 0.0
        %634 = vmatprep.subr.mxu0 0.0
        %635 = vmatpush2.msra.mxu0 0.0
        %636 = vmatprep.subr.mxu0 0.0
        %637 = vmatpush2.msra.mxu0 0.0
        %638 = vmatprep.subr.mxu0 0.0
        %639 = vmatpush2.msra.mxu0 0.0
        %640 = vmatprep.subr.mxu0 0.0
        %641 = vmatpush2.msra.mxu0 0.0
        %642 = vmatprep.subr.mxu0 0.0
        %643 = vmatpush2.msra.mxu0 0.0
        %644 = vmatprep.subr.mxu0 0.0
        %645 = vmatpush2.msra.mxu0 0.0
        %646 = vmatprep.subr.mxu0 0.0
        %647 = vmatpush2.msra.mxu0 0.0
        %648 = vmatprep.subr.mxu0 0.0
        %649 = vmatpush2.msra.mxu0 0.0
        %650 = vmatprep.subr.mxu0 0.0
        %651 = vmatpush2.msra.mxu0 0.0
        %652 = vmatprep.subr.mxu0 0.0
        %653 = vmatpush2.msra.mxu0 0.0
        %654 = vmatprep.subr.mxu0 0.0
        %655 = vmatpush2.msra.mxu0 0.0
        %656 = vmatprep.subr.mxu0 0.0
        %657 = vmatpush2.msra.mxu0 0.0
        %658 = vmatprep.subr.mxu0 0.0
        %659 = vmatpush2.msra.mxu0 0.0
        %660 = vmatprep.subr.mxu0 0.0
        %661 = vmatpush2.msra.mxu0 0.0
        %662 = vmatprep.subr.mxu0 0.0
        %663 = vmatpush2.msra.mxu0 0.0
        %664 = vmatprep.mubr.f32.mxu0 0.0
        %665 = vmatmul.mubr.f32.gmra.mxu0 %v595
        %v666 = vpop.f32.mrf.mxu0
        %v667 = vadd.f32 %v591, %v666
        %v668 = vpop.f32.mrf.mxu0
        %669 = vmatprep.mubr.f32.mxu0 0.0
        %670 = vmatmul.mubr.f32.gmra.mxu0 %v598
        %v671 = vpop.f32.mrf.mxu0
        %v672 = vadd.f32 %v591, %v671
        %v673 = vpop.f32.mrf.mxu0
        %674 = vdwg.mxu0
        %v675 = vsel %vm494, %v667, 0.0
        %v676 = vsel %vm494, %v672, 0.0
        %v677 = vadd.f32 %v675, %v676
        %v678 = vrot.slane %v677, 4
        %v679 = vadd.f32 %v677, %v678
        %v680 = vrot.slane %v679, 2
        %v681 = vadd.f32 %v679, %v680
        %v682 = vrot.slane %v681, 1
        %v683 = vadd.f32 %v681, %v682
        %v684 = vrcp.pop 16.0
        %v685 = vmul.f32 %v683, %v684
        %v686 = vsub.f32 %v667, %v685
        %v687 = vsub.f32 %v672, %v685
        %v688 = vmul.f32 %v686, %v686
        %v689 = vmul.f32 %v687, %v687
        %v690 = vsel %vm494, %v688, 0.0
        %v691 = vsel %vm494, %v689, 0.0
        %v692 = vadd.f32 %v690, %v691
        %v693 = vrot.slane %v692, 4
        %v694 = vadd.f32 %v692, %v693
        %v695 = vrot.slane %v694, 2
        %v696 = vadd.f32 %v694, %v695
        %v697 = vrot.slane %v696, 1
        %v698 = vadd.f32 %v696, %v697
        %v699 = vmul.f32 %v698, %v684
        %v700 = vadd.f32 %v699, 1e-05
        %v701 = vrsqrt.pop %v700
        %v702 = vmul.f32 %v686, %v701
        %v703 = vmul.f32 %v687, %v701
        %v704 = vld [vmem:[%s411] sm:$0x1]
        %v706 = vlaneseq
        %v707 = vshrl.u32 %v706, 7
        %v708 = vsub.s32 0, %v707
        %v709 = vrot.slane %v704, %v708
        %v711 = vmul.f32 %v702, %v709
        %v712 = vmul.f32 %v703, %v709
        %v713 = vld [vmem:[%s414] sm:$0x1]
        %v715 = vlaneseq
        %v716 = vshrl.u32 %v715, 7
        %v717 = vsub.s32 0, %v716
        %v718 = vrot.slane %v713, %v717
        %v720 = vadd.f32 %v711, %v718
        %v721 = vadd.f32 %v712, %v718
        %722 = vst.msk [vmem:[#allocation2] sm:$0xff] %vm494, %v720
        %723 = vst.msk [vmem:[#allocation2 + $0x8] sm:$0xff] %vm494, %v721
        %p724 = scmp.ne.s32.totalorder %s21, 4
        // Predicated region
        $region61: #{tpu_custom_call.1} parent=55 // pred_check
          %p725 = pneg %p724
        $region62: #{tpu_custom_call.1} parent=55 // pred_check_branch
          %727 = sbr.rel (%p725) target = $region64
        $region63: #{tpu_custom_call.1} parent=55 // pred_region
          %v728 = vmax.f32 %v720, 0.0
          %v729 = vmax.f32 %v721, 0.0
          %730 = vst.msk [vmem:[#allocation2] sm:$0xff] %vm494, %v728
          %731 = vst.msk [vmem:[#allocation2 + $0x8] sm:$0xff] %vm494, %v729
        $region64: #{tpu_custom_call.1} parent=55 // pred_fallthru
          _
        // Predicated region
        $region65: #{tpu_custom_call.1} parent=55 // pred_check
          %p732 = pneg %p416
        $region66: #{tpu_custom_call.1} parent=55 // pred_check_branch
          %734 = sbr.rel (%p732) target = $region68
        $region67: #{tpu_custom_call.1} parent=55 // pred_region
          %735 = vst.msk [vmem:[#allocation3] sm:$0xff] %vm494, %v720
          %736 = vst.msk [vmem:[#allocation3 + $0x8] sm:$0xff] %vm494, %v721
        $region68: #{tpu_custom_call.1} parent=55 // pred_fallthru
          _
        // Predicated region
        $region69: #{tpu_custom_call.1} parent=55 // pred_check
          %p737 = pneg %p258
        $region70: #{tpu_custom_call.1} parent=55 // pred_check_branch
          %739 = sbr.rel (%p737) target = $region72
        $region71: #{tpu_custom_call.1} parent=55 // pred_region
          %s741 = ssub.s32 256, 256
          %742 = vsyncadd [#allocation4], %s741
          %s743 = sshll.u32 [#allocation3], 4
          %s744 = int_to_ptr.vmem [resolvable:$true] %s743
          %749 = dma.vmem_to_hbm [thread:$0]  %s744, 256, %s9, [#allocation4], 128, 128, 8
        $region72: #{tpu_custom_call.1} parent=55 // pred_fallthru
          _
        // Predicated region
        $region73: #{tpu_custom_call.1} parent=55 // pred_check
          %p750 = pneg %p258
        $region74: #{tpu_custom_call.1} parent=55 // pred_check_branch
          %752 = sbr.rel (%p750) target = $region76
        $region75: #{tpu_custom_call.1} parent=55 // pred_region
          %753 = dma.done [#allocation4], 256
        $region76: #{tpu_custom_call.1} parent=55 // pred_fallthru
          _
      $region56: #{tpu_custom_call.1} parent=5 // pred_fallthru
        _
      %p754 = scmp.le.s32.totalorder 2, %s16
      // Predicated region
      $region77: #{tpu_custom_call.1} parent=5 // pred_check
        %p755 = pneg %p754
      $region78: #{tpu_custom_call.1} parent=5 // pred_check_branch
        %757 = sbr.rel (%p755) target = $region80
      $region79: #{tpu_custom_call.1} parent=5 // pred_region
        %s758 = ssub.s32 %s16, 2
      $region80: #{tpu_custom_call.1} parent=5 // pred_fallthru
        _
    $region6: #{tpu_custom_call.1} parent=1 // loop_footer
      %s20 = sadd.s32 1, %s16
    $region7: #{tpu_custom_call.1} parent=1 // loop_footer_branch
      %15 = sbr.rel target = $region3
    $region8: #{tpu_custom_call.1} parent=1 // loop_exit
      _
    %759 = vsyncpa [#allocation4], 1
    %s760 = scalar_lea.sflag [#allocation4], 1
    %761 = vsyncpa %s760, 1

</llo_original>
